<compile_context>
chip_gen: v6e
topology: v6e:2x2x1
jax: 0.10.0
libtpu: 0.0.40
codegen_flags: <defaults>
</compile_context>

<pallas_src>
import math

import jax
import jax.numpy as jnp
from jax.experimental import pallas as pl
from jax.experimental.pallas import tpu as pltpu


def _round_up(v, m):
    return (v + m - 1) // m * m


def _vmem_budget():
    """Per-core VMEM budget (bytes) with ~25% headroom for compiler scratch."""
    try:
        info = pltpu.get_tpu_info()
        cap = int(getattr(info, "vmem_capacity_bytes", 0)) or 128 * 1024 * 1024
    except Exception:
        cap = 128 * 1024 * 1024
    return cap * 3 // 4            # ~48 MiB on v7x, ~96 MiB on v5e/v6e


# ------------------------------ kernels -------------------------------------
def _linear_bias_kernel(x_ref, w_ref, b_ref, o_ref):
    # Whole reduction fits one block: single MXU matmul, f32 accumulate,
    # bias added in f32, lane-dense store.
    acc = jnp.dot(x_ref[...], w_ref[...], preferred_element_type=jnp.float32)
    o_ref[...] = (acc + b_ref[...]).astype(o_ref.dtype)


def _linear_bias_acc_kernel(x_ref, w_ref, b_ref, o_ref, acc_ref):
    # grid = (m, j, k); k (reduction) innermost, output tile resident across k.
    k = pl.program_id(2)

    @pl.when(k == 0)
    def _init():
        acc_ref[...] = jnp.zeros_like(acc_ref)

    acc_ref[...] += jnp.dot(x_ref[...], w_ref[...],
                            preferred_element_type=jnp.float32)

    @pl.when(k == pl.num_programs(2) - 1)
    def _store():
        o_ref[...] = (acc_ref[...] + b_ref[...]).astype(o_ref.dtype)


# --------------------------- tiled linear wrapper ---------------------------
def _tiled_linear(xp, wp, bp, out_dtype, *, tm, tn, tk):
    """xp: (Mp, Kp), wp: (Kp, Np), bp: (1, Np) f32.  All dims pre-padded."""
    Mp, Kp = xp.shape
    Kp2, Np = wp.shape
    assert Kp == Kp2 and bp.shape == (1, Np)
    assert Mp % tm == 0 and Np % tn == 0 and Kp % tk == 0
    nk = Kp // tk

    x_isz = xp.dtype.itemsize
    w_isz = wp.dtype.itemsize
    b_isz = bp.dtype.itemsize
    o_isz = jnp.dtype(out_dtype).itemsize

    cost = pl.CostEstimate(
        flops=int(2 * Mp * Kp * Np),
        transcendentals=0,
        bytes_accessed=int(Mp * Kp * x_isz + Kp * Np * w_isz
                           + Np * b_isz + Mp * Np * o_isz),
    )

    # Double-buffered per-step working set (+ f32 accumulator when chunked).
    x_blk = tm * (Kp if nk == 1 else tk)
    est = 2 * (x_blk * x_isz + tk * tn * w_isz + tn * b_isz + tm * tn * o_isz)
    if nk > 1:
        est += tm * tn * 4
    vmem_limit = int(min(max(est * 5 // 4, 32 * 1024 * 1024), _vmem_budget()))

    if nk == 1:
        # Collapsed reduction: no k axis, no accumulator scratch, no pl.when.
        return pl.pallas_call(
            _linear_bias_kernel,
            out_shape=jax.ShapeDtypeStruct((Mp, Np), out_dtype),
            grid_spec=pltpu.PrefetchScalarGridSpec(
                num_scalar_prefetch=0,
                grid=(Mp // tm, Np // tn),
                in_specs=[
                    pl.BlockSpec((tm, Kp), lambda m, j: (m, 0)),
                    pl.BlockSpec((Kp, tn), lambda m, j: (0, j)),
                    pl.BlockSpec((1, tn), lambda m, j: (0, j)),
                ],
                out_specs=pl.BlockSpec((tm, tn), lambda m, j: (m, j)),
            ),
            compiler_params=pltpu.CompilerParams(
                dimension_semantics=("parallel", "parallel"),
                vmem_limit_bytes=vmem_limit,
            ),
            cost_estimate=cost,
        )(xp, wp, bp)

    return pl.pallas_call(
        _linear_bias_acc_kernel,
        out_shape=jax.ShapeDtypeStruct((Mp, Np), out_dtype),
        grid_spec=pltpu.PrefetchScalarGridSpec(
            num_scalar_prefetch=0,
            grid=(Mp // tm, Np // tn, nk),
            in_specs=[
                pl.BlockSpec((tm, tk), lambda m, j, k: (m, k)),
                pl.BlockSpec((tk, tn), lambda m, j, k: (k, j)),
                pl.BlockSpec((1, tn), lambda m, j, k: (0, j)),
            ],
            out_specs=pl.BlockSpec((tm, tn), lambda m, j, k: (m, j)),
            scratch_shapes=[pltpu.VMEM((tm, tn), jnp.float32)],
        ),
        compiler_params=pltpu.CompilerParams(
            dimension_semantics=("parallel", "parallel", "arbitrary"),
            vmem_limit_bytes=vmem_limit,
        ),
        cost_estimate=cost,
    )(xp, wp, bp)


# ----------------------- one-time weight preparation ------------------------
def prepare_next_token_params(w2, b2, w1=None, b1=None, *,
                              weight_dtype=jnp.bfloat16):
    """Pad/cast/lay out the weights ONCE (not per forward call).

    w1: (in_dim, mid) or None (pre_lin absent), b1: (mid,)
    w2: (mid_or_in, vocab), b2: (vocab,)
    """
    has_pre = w1 is not None
    mid, vocab = w2.shape
    if has_pre:
        in_dim, mid_ = w1.shape
        assert mid_ == mid and b1.shape == (mid,)
    else:
        in_dim = mid
    assert b2.shape == (vocab,)

    # Tile of the "mid" dim: pre_lin output tile == lin reduction chunk.
    t_mid = min(_round_up(mid, 128), 2048)
    midp = _round_up(mid, t_mid)

    # Vocab tile: aim for a ~4 MiB double-bufferable W2 block, lane-dense.
    wbytes = jnp.dtype(weight_dtype).itemsize
    t_vocab = (4 * 1024 * 1024) // (t_mid * wbytes)
    t_vocab = max(256, min(4096, (t_vocab // 128) * 128))
    t_vocab = min(t_vocab, _round_up(vocab, 128))
    vocabp = _round_up(vocab, t_vocab)

    arrays = {}
    t_in = inp = None
    if has_pre:
        t_in = min(_round_up(in_dim, 128), 4096)
        inp = _round_up(in_dim, t_in)
        arrays["w1p"] = jnp.pad(w1.astype(weight_dtype),
                                ((0, inp - in_dim), (0, midp - mid)))
        arrays["b1p"] = jnp.pad(b1.astype(jnp.float32),
                                (0, midp - mid)).reshape(1, midp)
    arrays["w2p"] = jnp.pad(w2.astype(weight_dtype),
                            ((0, midp - mid), (0, vocabp - vocab)))
    arrays["b2p"] = jnp.pad(b2.astype(jnp.float32),
                            (0, vocabp - vocab)).reshape(1, vocabp)

    meta = dict(has_pre=has_pre, in_dim=in_dim, mid=mid, vocab=vocab,
                inp=inp, midp=midp, vocabp=vocabp,
                t_in=t_in, t_mid=t_mid, t_vocab=t_vocab,
                weight_dtype=weight_dtype)
    return arrays, meta


# -------------------------------- forward ------------------------------------
def _forward_2d(xf, arrays, meta):
    M, in_dim = xf.shape
    assert in_dim == meta["in_dim"]
    out_dtype = xf.dtype
    cdt = meta["weight_dtype"]

    # Decode-friendly row tiling: single row block for small batches.
    if M <= 512:
        tm = _round_up(M, 8)
        Mp = tm
    else:
        tm = 512
        Mp = _round_up(M, tm)

    if meta["has_pre"]:
        inp = meta["inp"]
        xp = jnp.pad(xf, ((0, Mp - M), (0, inp - in_dim))).astype(cdt)
        # pre_lin hoisted into its own (tiny) pass: H computed once,
        # not once per vocab tile.  Zero-padded columns of H stay zero.
        h = _tiled_linear(xp, arrays["w1p"], arrays["b1p"], cdt,
                          tm=tm, tn=meta["t_mid"], tk=meta["t_in"])
    else:
        midp = meta["midp"]
        h = jnp.pad(xf, ((0, Mp - M), (0, midp - in_dim))).astype(cdt)

    logits = _tiled_linear(h, arrays["w2p"], arrays["b2p"], out_dtype,
                           tm=tm, tn=meta["t_vocab"], tk=meta["t_mid"])
    return logits[:M, :meta["vocab"]]


def next_token_prediction_forward(X, params):
    """Mirrors NextTokenPrediction.forward."""
    arrays, meta = params
    if X.ndim >= 3:
        xf = X.reshape(X.shape[0], -1)          # torch.flatten(X, start_dim=1)
        return _forward_2d(xf, arrays, meta)
    xf = X.reshape(1, -1)                       # torch.flatten(X, start_dim=0)
    return _forward_2d(xf, arrays, meta)[0]


def _ref(xf, w1, b1, w2, b2):
    return (xf @ w1 + b1) @ w2 + b2


if __name__ == "__main__":
    key = jax.random.PRNGKey(0)
    batch = 2
    context_length = 8
    embedding_dim = 32
    last_embedding_dim = 16
    vocab_size = 1000                    # deliberately not a multiple of 128

    in_dim = embedding_dim * context_length            # 256
    mid_dim = last_embedding_dim * context_length      # 128

    kx, kw1, kb1, kw2, kb2, kw3 = jax.random.split(key, 6)

    # nn.Linear layout: weight (out, in), bias (out,); transpose to (in, out).
    bound1 = 1.0 / math.sqrt(in_dim)
    w1 = jax.random.uniform(kw1, (mid_dim, in_dim), jnp.float32, -bound1, bound1).T
    b1 = jax.random.uniform(kb1, (mid_dim,), jnp.float32, -bound1, bound1)
    bound2 = 1.0 / math.sqrt(mid_dim)
    w2 = jax.random.uniform(kw2, (vocab_size, mid_dim), jnp.float32, -bound2, bound2).T
    b2 = jax.random.uniform(kb2, (vocab_size,), jnp.float32, -bound2, bound2)

    # One-time weight preparation (pad / cast / layout).
    params = prepare_next_token_params(w2, b2, w1=w1, b1=b1)

    # bf16 weights + bf16 matmul inputs (f32 accumulate) -> loosened tolerance.
    TOL = dict(atol=5e-2, rtol=5e-2)

    # 3-D input path: (batch, context_length, embedding_dim)
    X3 = jax.random.normal(kx, (batch, context_length, embedding_dim), jnp.float32)
    logits = jax.block_until_ready(next_token_prediction_forward(X3, params))
    assert logits.shape == (batch, vocab_size)
    ref = _ref(X3.reshape(batch, -1), w1, b1, w2, b2)
    assert jnp.allclose(logits, ref, **TOL), "mismatch (3-D path)"

    # < 3-D input path: fully flattened -> (vocab,)
    X2 = X3[0]
    logits1 = jax.block_until_ready(next_token_prediction_forward(X2, params))
    assert logits1.shape == (vocab_size,)
    ref1 = _ref(X2.reshape(1, -1), w1, b1, w2, b2)[0]
    assert jnp.allclose(logits1, ref1, **TOL), "mismatch (flat path)"

    # no-pre_lin configuration ('last_embedding_dim' absent from config)
    bound3 = 1.0 / math.sqrt(in_dim)
    w_only = jax.random.uniform(kw3, (vocab_size, in_dim), jnp.float32,
                                -bound3, bound3).T
    params_np = prepare_next_token_params(w_only, b2)
    logits_np = jax.block_until_ready(next_token_prediction_forward(X3, params_np))
    ref_np = X3.reshape(batch, -1) @ w_only + b2
    assert logits_np.shape == (batch, vocab_size)
    assert jnp.allclose(logits_np, ref_np, **TOL), "mismatch (no-pre_lin path)"

    # greedy next-token pick (get_next_token_idx default path) -- host-side argmax
    _ = int(jnp.argmax(logits1))

    print("KERNEL_OK")
</pallas_src>

<mosaic_0001>
module attributes {stable_mosaic.version = 11 : i64} {
  func.func @_linear_bias_kernel(%arg0: i32, %arg1: i32, %arg2: memref<8x256xbf16, #tpu.memory_space<vmem>>, %arg3: memref<256x128xbf16, #tpu.memory_space<vmem>>, %arg4: memref<1x128xf32, #tpu.memory_space<vmem>>, %arg5: memref<8x128xbf16, #tpu.memory_space<vmem>>) attributes {dimension_semantics = [#tpu.dimension_semantics<parallel>, #tpu.dimension_semantics<parallel>], iteration_bounds = array<i64: 1, 1>, scalar_prefetch = 0 : i64, scratch_operands = 0 : i64, tpu.core_type = #tpu.core_type<tc>, window_params = [{transform_indices = @transform_0, window_bounds = array<i64: 8, 256>}, {transform_indices = @transform_1, window_bounds = array<i64: 256, 128>}, {transform_indices = @transform_2, window_bounds = array<i64: 1, 128>}, {transform_indices = @transform_3, window_bounds = array<i64: 8, 128>}]} {
    %c0 = arith.constant 0 : index
    %c0_0 = arith.constant 0 : index
    %0 = vector.load %arg2[%c0, %c0_0] : memref<8x256xbf16, #tpu.memory_space<vmem>>, vector<8x256xbf16>
    %c0_1 = arith.constant 0 : index
    %c0_2 = arith.constant 0 : index
    %1 = vector.load %arg3[%c0_1, %c0_2] : memref<256x128xbf16, #tpu.memory_space<vmem>>, vector<256x128xbf16>
    %cst = arith.constant dense<0.000000e+00> : vector<8x128xf32>
    %2 = tpu.matmul %0, %1, %cst {dimension_numbers = #tpu.dot_dimension_numbers<[1], [0], [0], [1], [0, 0, 1, 1], [], []>} : vector<8x256xbf16>, vector<256x128xbf16>, vector<8x128xf32> -> vector<8x128xf32>
    %c0_3 = arith.constant 0 : index
    %c0_4 = arith.constant 0 : index
    %3 = vector.load %arg4[%c0_3, %c0_4] : memref<1x128xf32, #tpu.memory_space<vmem>>, vector<1x128xf32>
    %4 = vector.broadcast %3 : vector<1x128xf32> to vector<8x128xf32>
    %5 = arith.addf %2, %4 : vector<8x128xf32>
    %6 = arith.truncf %5 : vector<8x128xf32> to vector<8x128xbf16>
    %c0_5 = arith.constant 0 : index
    %c0_6 = arith.constant 0 : index
    %7 = vector.load %arg5[%c0_5, %c0_6] : memref<8x128xbf16, #tpu.memory_space<vmem>>, vector<8x128xbf16>
    tpu.vector_store %arg5[%c0_5, %c0_6], %6 {strides = array<i32>} : memref<8x128xbf16, #tpu.memory_space<vmem>>, vector<8x128xbf16>,
    return
  }
  func.func @transform_0(%arg0: i32, %arg1: i32) -> (i32, i32) {
    %c0_i32 = arith.constant 0 : i32
    %c0_i32_0 = arith.constant 0 : i32
    return %arg0, %c0_i32 : i32, i32
  }
  func.func @transform_1(%arg0: i32, %arg1: i32) -> (i32, i32) {
    %c0_i32 = arith.constant 0 : i32
    %c0_i32_0 = arith.constant 0 : i32
    return %c0_i32, %arg1 : i32, i32
  }
  func.func @transform_2(%arg0: i32, %arg1: i32) -> (i32, i32) {
    %c0_i32 = arith.constant 0 : i32
    %c0_i32_0 = arith.constant 0 : i32
    return %c0_i32, %arg1 : i32, i32
  }
  func.func @transform_3(%arg0: i32, %arg1: i32) -> (i32, i32) {
    %c0_i32 = arith.constant 0 : i32
    return %arg0, %arg1 : i32, i32
  }
}

</mosaic_0001>

<llo_original>
// kernel: tpu_custom_call.1
$region0: #{tpu_custom_call.1}
  #allocation0 [shape = 'u32[]', space=smem, size = 0x4, offset = 0x4, fixed_abs, tag = 'smem constant byte address 0x4 - core index']
  #allocation1 [shape = 'u32[144,128]{1,0:T(1,128)}', space=vmem, size = 0x12000, scoped, tag = 'internal scratch']
  %s0 = inlined_call_operand.hbm [shape: bf16[8,256], index: 0, kind: input, shape index: {}]
  %s1 = inlined_call_operand.hbm [shape: bf16[256,128], index: 1, kind: input, shape index: {}]
  %s2 = inlined_call_operand.vmem [shape: f32[1,128], index: 2, kind: input, shape index: {}]
  %s3 = inlined_call_operand.hbm [shape: bf16[8,128], index: 3, kind: output, shape index: {}]
  %s4 = sld [smem:[#allocation0]]
  $region30: #{tpu_custom_call.1} parent=0
    _
  %s6 = ssub.s32 1, %s4
  %s7 = scalar_select 0, %s6, %s4
  $region1: #{tpu_custom_call.1} parent=0
    #allocation2 [shape = 'u8[4096]{0}', space=vmem, size = 0x1000, scoped, tag = 'input window, operand 0, single buffered']
    #allocation3 [shape = 's32[1]{0}', space=sflag, size = 0x4, scoped, tag = 'scoped memory for tpu_custom_call.1']
    #allocation4 [shape = 's32[1]{0}', space=sflag, size = 0x4, scoped, tag = 'scoped memory for tpu_custom_call.1']
    #allocation5 [shape = 'u8[65536]{0}', space=vmem, size = 0x10000, scoped, tag = 'input window, operand 1, single buffered']
    #allocation6 [shape = 's32[1]{0}', space=sflag, size = 0x4, scoped, tag = 'scoped memory for tpu_custom_call.1']
    #allocation7 [shape = 'u8[2048]{0}', space=vmem, size = 0x800, scoped, tag = 'output window, operand 0, single buffered']
    %8 = vsyncpa [#allocation3], 0
    %9 = vsyncpa [#allocation6], 0
    %10 = vsyncpa [#allocation4], 0
    // Predicated region
    $region2: #{tpu_custom_call.1} parent=1 // pred_check
      _
    $region3: #{tpu_custom_call.1} parent=1 // pred_check_branch
      %12 = sbr.rel (0) target = $region5
    $region4: #{tpu_custom_call.1} parent=1 // pred_region
      %s14 = ssub.s32 128, 128
      %15 = vsyncadd [#allocation3], %s14
      %s17 = sshll.u32 [#allocation2], 4
      %s18 = int_to_ptr.vmem [resolvable:$true] %s17
      %20 = dma.hbm_to_vmem [thread:$0]  %s0, 128, %s18, [#allocation3]
    $region5: #{tpu_custom_call.1} parent=1 // pred_fallthru
      _
    // Predicated region
    $region6: #{tpu_custom_call.1} parent=1 // pred_check
      _
    $region7: #{tpu_custom_call.1} parent=1 // pred_check_branch
      %22 = sbr.rel (0) target = $region9
    $region8: #{tpu_custom_call.1} parent=1 // pred_region
      %s24 = ssub.s32 2048, 2048
      %25 = vsyncadd [#allocation6], %s24
      %s26 = sshll.u32 [#allocation5], 4
      %s27 = int_to_ptr.vmem [resolvable:$true] %s26
      %32 = dma.hbm_to_vmem [thread:$0]  %s1, 2048, %s27, [#allocation6], 64, 64, 4
    $region9: #{tpu_custom_call.1} parent=1 // pred_fallthru
      _
    // Predicated region
    $region10: #{tpu_custom_call.1} parent=1 // pred_check
      _
    $region11: #{tpu_custom_call.1} parent=1 // pred_check_branch
      %34 = sbr.rel (0) target = $region13
    $region12: #{tpu_custom_call.1} parent=1 // pred_region
      _
    $region13: #{tpu_custom_call.1} parent=1 // pred_fallthru
      _
    // Predicated region
    $region14: #{tpu_custom_call.1} parent=1 // pred_check
      _
    $region15: #{tpu_custom_call.1} parent=1 // pred_check_branch
      %36 = sbr.rel (0) target = $region17
    $region16: #{tpu_custom_call.1} parent=1 // pred_region
      %37 = dma.done [#allocation3], 128
    $region17: #{tpu_custom_call.1} parent=1 // pred_fallthru
      _
    // Predicated region
    $region18: #{tpu_custom_call.1} parent=1 // pred_check
      _
    $region19: #{tpu_custom_call.1} parent=1 // pred_check_branch
      %39 = sbr.rel (0) target = $region21
    $region20: #{tpu_custom_call.1} parent=1 // pred_region
      %40 = dma.done [#allocation6], 2048
    $region21: #{tpu_custom_call.1} parent=1 // pred_fallthru
      _
    %v42 = vld [vmem:[#allocation2] sm:$0xff]
    %v43 = vld [vmem:[#allocation5] sm:$0xf]
    %v44 = vld [vmem:[#allocation5 + $0x4] sm:$0xf]
    %v45 = vld [vmem:[#allocation5 + $0x8] sm:$0xf]
    %v46 = vld [vmem:[#allocation5 + $0xc] sm:$0xf]
    %v47 = vld [vmem:[#allocation5 + $0x10] sm:$0xf]
    %v48 = vld [vmem:[#allocation5 + $0x14] sm:$0xf]
    %v49 = vld [vmem:[#allocation5 + $0x18] sm:$0xf]
    %v50 = vld [vmem:[#allocation5 + $0x1c] sm:$0xf]
    %v51 = vld [vmem:[#allocation5 + $0x20] sm:$0xf]
    %v52 = vld [vmem:[#allocation5 + $0x24] sm:$0xf]
    %v53 = vld [vmem:[#allocation5 + $0x28] sm:$0xf]
    %v54 = vld [vmem:[#allocation5 + $0x2c] sm:$0xf]
    %v55 = vld [vmem:[#allocation5 + $0x30] sm:$0xf]
    %v56 = vld [vmem:[#allocation5 + $0x34] sm:$0xf]
    %v57 = vld [vmem:[#allocation5 + $0x38] sm:$0xf]
    %v58 = vld [vmem:[#allocation5 + $0x3c] sm:$0xf]
    %v59 = vld [vmem:[#allocation5 + $0x40] sm:$0xf]
    %v60 = vld [vmem:[#allocation5 + $0x44] sm:$0xf]
    %v61 = vld [vmem:[#allocation5 + $0x48] sm:$0xf]
    %v62 = vld [vmem:[#allocation5 + $0x4c] sm:$0xf]
    %v63 = vld [vmem:[#allocation5 + $0x50] sm:$0xf]
    %v64 = vld [vmem:[#allocation5 + $0x54] sm:$0xf]
    %v65 = vld [vmem:[#allocation5 + $0x58] sm:$0xf]
    %v66 = vld [vmem:[#allocation5 + $0x5c] sm:$0xf]
    %v67 = vld [vmem:[#allocation5 + $0x60] sm:$0xf]
    %v68 = vld [vmem:[#allocation5 + $0x64] sm:$0xf]
    %v69 = vld [vmem:[#allocation5 + $0x68] sm:$0xf]
    %v70 = vld [vmem:[#allocation5 + $0x6c] sm:$0xf]
    %v71 = vld [vmem:[#allocation5 + $0x70] sm:$0xf]
    %v72 = vld [vmem:[#allocation5 + $0x74] sm:$0xf]
    %v73 = vld [vmem:[#allocation5 + $0x78] sm:$0xf]
    %v74 = vld [vmem:[#allocation5 + $0x7c] sm:$0xf]
    %v75 = vld [vmem:[%s2] sm:$0x1]
    %v77 = vlaneseq
    %v78 = vshrl.u32 %v77, 7
    %v79 = vsub.s32 0, %v78
    %v80 = vrot.slane %v75, %v79
    %v83 = vunpack.c.l.b16 %v42
    %v84 = vunpack.c.h.b16 %v42
    %v85 = vpack.c.b16 %v83, %v83
    %v86 = vpack.c.b16 %v84, %v84
    %v121 = vunpack.c.l.b16 %v43
    %v122 = vunpack.c.l.b16 %v44
    %v123 = vunpack.c.l.b16 %v45
    %v124 = vunpack.c.l.b16 %v46
    %v125 = vunpack.c.l.b16 %v47
    %v126 = vunpack.c.l.b16 %v48
    %v127 = vunpack.c.l.b16 %v49
    %v128 = vunpack.c.l.b16 %v50
    %v129 = vunpack.c.l.b16 %v51
    %v130 = vunpack.c.l.b16 %v52
    %v131 = vunpack.c.l.b16 %v53
    %v132 = vunpack.c.l.b16 %v54
    %v133 = vunpack.c.l.b16 %v55
    %v134 = vunpack.c.l.b16 %v56
    %v135 = vunpack.c.l.b16 %v57
    %v136 = vunpack.c.l.b16 %v58
    %v137 = vunpack.c.l.b16 %v59
    %v138 = vunpack.c.l.b16 %v60
    %v139 = vunpack.c.l.b16 %v61
    %v140 = vunpack.c.l.b16 %v62
    %v141 = vunpack.c.l.b16 %v63
    %v142 = vunpack.c.l.b16 %v64
    %v143 = vunpack.c.l.b16 %v65
    %v144 = vunpack.c.l.b16 %v66
    %v145 = vunpack.c.l.b16 %v67
    %v146 = vunpack.c.l.b16 %v68
    %v147 = vunpack.c.l.b16 %v69
    %v148 = vunpack.c.l.b16 %v70
    %v149 = vunpack.c.l.b16 %v71
    %v150 = vunpack.c.l.b16 %v72
    %v151 = vunpack.c.l.b16 %v73
    %v152 = vunpack.c.l.b16 %v74
    %v153 = vpack.c.b16 %v122, %v121
    %v154 = vpack.c.b16 %v124, %v123
    %v155 = vpack.c.b16 %v126, %v125
    %v156 = vpack.c.b16 %v128, %v127
    %v157 = vpack.c.b16 %v130, %v129
    %v158 = vpack.c.b16 %v132, %v131
    %v159 = vpack.c.b16 %v134, %v133
    %v160 = vpack.c.b16 %v136, %v135
    %v161 = vpack.c.b16 %v138, %v137
    %v162 = vpack.c.b16 %v140, %v139
    %v163 = vpack.c.b16 %v142, %v141
    %v164 = vpack.c.b16 %v144, %v143
    %v165 = vpack.c.b16 %v146, %v145
    %v166 = vpack.c.b16 %v148, %v147
    %v167 = vpack.c.b16 %v150, %v149
    %v168 = vpack.c.b16 %v152, %v151
    %185 = vmatprep.subr.bf16.mxu0 0
    %186 = vmatpush1.bf16.msra.mxu0 %v160
    %187 = vmatprep.subr.bf16.mxu0 0
    %188 = vmatpush1.bf16.msra.mxu0 %v159
    %189 = vmatprep.subr.bf16.mxu0 0
    %190 = vmatpush1.bf16.msra.mxu0 %v158
    %191 = vmatprep.subr.bf16.mxu0 0
    %192 = vmatpush1.bf16.msra.mxu0 %v157
    %193 = vmatprep.subr.bf16.mxu0 0
    %194 = vmatpush1.bf16.msra.mxu0 %v156
    %195 = vmatprep.subr.bf16.mxu0 0
    %196 = vmatpush1.bf16.msra.mxu0 %v155
    %197 = vmatprep.subr.bf16.mxu0 0
    %198 = vmatpush1.bf16.msra.mxu0 %v154
    %199 = vmatprep.subr.bf16.mxu0 0
    %200 = vmatpush1.bf16.msra.mxu0 %v153
    %201 = vmatprep.subr.bf16.mxu0 0
    %202 = vmatpush2.bf16.msra.mxu0 %v168
    %203 = vmatprep.subr.bf16.mxu0 0
    %204 = vmatpush2.bf16.msra.mxu0 %v167
    %205 = vmatprep.subr.bf16.mxu0 0
    %206 = vmatpush2.bf16.msra.mxu0 %v166
    %207 = vmatprep.subr.bf16.mxu0 0
    %208 = vmatpush2.bf16.msra.mxu0 %v165
    %209 = vmatprep.subr.bf16.mxu0 0
    %210 = vmatpush2.bf16.msra.mxu0 %v164
    %211 = vmatprep.subr.bf16.mxu0 0
    %212 = vmatpush2.bf16.msra.mxu0 %v163
    %213 = vmatprep.subr.bf16.mxu0 0
    %214 = vmatpush2.bf16.msra.mxu0 %v162
    %215 = vmatprep.subr.bf16.mxu0 0
    %216 = vmatpush2.bf16.msra.mxu0 %v161
    %217 = vmatprep.mubr.bf16.mxu0 %v86
    %218 = vmatmul.mubr.bf16.gmra.mxu0 %v85
    %v219 = vpop.f32.mrf.mxu0
    %v220 = vadd.f32 %v80, %v219
    %v221 = vpop.f32.mrf.mxu0
    %v222 = vpop.f32.mrf.mxu0
    %v223 = vpop.f32.mrf.mxu0
    %224 = vdwg.mxu0
    %v225 = vpack.c.bf16 %v220, %v220
    %226 = vst [vmem:[#allocation7] sm:$0xf] %v225
    // Predicated region
    $region22: #{tpu_custom_call.1} parent=1 // pred_check
      _
    $region23: #{tpu_custom_call.1} parent=1 // pred_check_branch
      %228 = sbr.rel (0) target = $region25
    $region24: #{tpu_custom_call.1} parent=1 // pred_region
      %s230 = ssub.s32 64, 64
      %231 = vsyncadd [#allocation4], %s230
      %s233 = sshll.u32 [#allocation7], 4
      %s234 = int_to_ptr.vmem [resolvable:$true] %s233
      %236 = dma.vmem_to_hbm [thread:$0]  %s234, 64, %s3, [#allocation4]
    $region25: #{tpu_custom_call.1} parent=1 // pred_fallthru
      _
    // Predicated region
    $region26: #{tpu_custom_call.1} parent=1 // pred_check
      _
    $region27: #{tpu_custom_call.1} parent=1 // pred_check_branch
      %238 = sbr.rel (0) target = $region29
    $region28: #{tpu_custom_call.1} parent=1 // pred_region
      %239 = dma.done [#allocation4], 64
    $region29: #{tpu_custom_call.1} parent=1 // pred_fallthru
      _
    %240 = vsyncpa [#allocation3], 1
    %241 = vsyncpa [#allocation6], 1
    %242 = vsyncpa [#allocation4], 1

</llo_original>
